<compile_context>
chip_gen: v5e
topology: v5e:2x2
jax: 0.10.0
libtpu: 0.0.40
codegen_flags: <defaults>
</compile_context>

<pallas_src>
import functools
import math

import jax
import jax.numpy as jnp
from jax.experimental import pallas as pl
from jax.experimental.pallas import tpu as pltpu


def _attention_kernel(x_ref, wqkv_ref, bqkv_ref, wproj_ref, bproj_ref, o_ref,
                      attn_ref, *, n_heads, head_dim, block_b, seq_pad,
                      n_valid, heads_per_group):
    H, Dh, Np = n_heads, head_dim, seq_pad
    C = H * Dh
    rows = block_b * Np
    scale = 1.0 / math.sqrt(Dh)

    # ---- qkv projection over all rows in the batch tile: (rows, 3C), f32 acc.
    qkv = jnp.dot(x_ref[...], wqkv_ref[...],
                  preferred_element_type=jnp.float32)        # (rows, 3C) f32
    qkv = qkv + bqkv_ref[...]                                # bias broadcast

    # One full-tile f32->bf16 cast; fold the softmax scale into the q columns
    # (rows*C muls instead of per-head rows*N muls / per-head casts).
    q_all = (qkv[:, :C] * scale).astype(jnp.bfloat16)        # (rows, C)
    k_all = qkv[:, C:2 * C].astype(jnp.bfloat16)             # (rows, C)
    v_all = qkv[:, 2 * C:].astype(jnp.bfloat16)              # (rows, C)

    # Key mask for sequence padding (static: compiled out when Np == n_valid).
    if n_valid < Np:
        key_ids = jax.lax.broadcasted_iota(jnp.int32, (1, 1, Np), 2)
        key_mask = jnp.where(key_ids < n_valid, 0.0, -1e30).astype(jnp.float32)
    else:
        key_mask = None

    group_w = heads_per_group * Dh
    for g in range(H // heads_per_group):
        outs = []
        for hh in range(heads_per_group):
            h = g * heads_per_group + hh
            q3 = q_all[:, h * Dh:(h + 1) * Dh].reshape(block_b, Np, Dh)
            k3 = k_all[:, h * Dh:(h + 1) * Dh].reshape(block_b, Np, Dh)
            v3 = v_all[:, h * Dh:(h + 1) * Dh].reshape(block_b, Np, Dh)

            # Scores: contraction on the last dim -> no explicit K transpose.
            s = jnp.einsum('bnd,bmd->bnm', q3, k3,
                           preferred_element_type=jnp.float32)  # (b, Np, Np)
            if key_mask is not None:
                s = s + key_mask

            # Numerically-stable softmax (f32); normalization is deferred.
            s = s - jnp.max(s, axis=-1, keepdims=True)
            p = jnp.exp(s)
            denom = jnp.sum(p, axis=-1, keepdims=True)          # (b, Np, 1)

            o3 = jnp.einsum('bnm,bmd->bnd', p.astype(jnp.bfloat16), v3,
                            preferred_element_type=jnp.float32)  # (b, Np, Dh)
            # Deferred normalization: multiply the (Np, Dh) output instead of
            # the (Np, Np) probabilities; reciprocal goes to the EUP slot.
            o3 = o3 * pl.reciprocal(denom, approx=True)
            outs.append(o3.astype(jnp.bfloat16).reshape(rows, Dh))

        # Lane-dense store of the whole head-group column slice.
        blk = outs[0] if len(outs) == 1 else jnp.concatenate(outs, axis=-1)
        attn_ref[:, g * group_w:(g + 1) * group_w] = blk

    # ---- output projection over all rows in the batch tile (scratch is bf16).
    out = jnp.dot(attn_ref[...], wproj_ref[...],
                  preferred_element_type=jnp.float32)            # (rows, C) f32
    out = out + bproj_ref[...]
    o_ref[...] = out.astype(o_ref.dtype)


def _pick_block_b(B, N_pad, target_rows=1024):
    """Largest divisor of B with block_b*N_pad <= target_rows, capped at B//2
    so the parallel grid axis has at least 2 steps (v7x 2-TC megacore)."""
    cap = max(1, B // 2) if B >= 2 else 1
    best = 1
    for d in range(1, cap + 1):
        if B % d == 0 and d * N_pad <= target_rows:
            best = d
    return best


def attention_pallas(x, w_qkv, b_qkv, w_proj, b_proj, *, n_heads, block_b=None):
    """x: (B, N, C); w_qkv: (C, 3C); b_qkv: (3C,); w_proj: (C, C); b_proj: (C,)."""
    B, N, C = x.shape
    head_dim = C // n_heads
    N_pad = ((N + 7) // 8) * 8                 # sublane (8) divisibility
    if block_b is None:
        block_b = _pick_block_b(B, N_pad)
    assert B % block_b == 0
    rows = block_b * N_pad

    # Head grouping so each scratch store covers >= 128 lanes (or all of C).
    heads_per_group = min(n_heads, max(1, 128 // head_dim))
    while n_heads % heads_per_group:
        heads_per_group -= 1

    # bf16 operands for the MXU matmuls (f32 accumulation in-kernel).
    x_p = x if N_pad == N else jnp.pad(x, ((0, 0), (0, N_pad - N), (0, 0)))
    x2 = x_p.reshape(B * N_pad, C).astype(jnp.bfloat16)
    wqkv_bf = w_qkv.astype(jnp.bfloat16)
    wproj_bf = w_proj.astype(jnp.bfloat16)
    bqkv2 = b_qkv.reshape(1, 3 * C).astype(jnp.float32)
    bproj2 = b_proj.reshape(1, C).astype(jnp.float32)

    # Explicit VMEM budget: double-buffered x/out tiles, single-buffered
    # weights, bf16 scratch, plus live qkv / score temps (with slack).
    out_itemsize = jnp.dtype(x.dtype).itemsize
    vmem_est = (
        2 * rows * C * 2 +                       # x tile (bf16, 2 bufs)
        2 * rows * C * out_itemsize +            # out tile (2 bufs)
        (C * 3 * C + C * C) * 2 +                # weights (bf16, 1 buf)
        (3 * C + C) * 4 +                        # biases (f32, 1 buf)
        rows * C * 2 +                           # attn scratch (bf16)
        rows * 3 * C * (4 + 2) +                 # qkv f32 + bf16 copies
        2 * block_b * N_pad * N_pad * 4          # scores + probs (f32)
    )
    vmem_limit = max(32 << 20, min(int(vmem_est * 1.5) + (4 << 20), 100 << 20))

    kernel = functools.partial(
        _attention_kernel, n_heads=n_heads, head_dim=head_dim,
        block_b=block_b, seq_pad=N_pad, n_valid=N,
        heads_per_group=heads_per_group)

    invariant = pl.Buffered(1)  # grid-invariant operands: single VMEM buffer
    out2 = pl.pallas_call(
        kernel,
        out_shape=jax.ShapeDtypeStruct((B * N_pad, C), x.dtype),
        grid_spec=pltpu.PrefetchScalarGridSpec(
            num_scalar_prefetch=0,
            grid=(B // block_b,),
            in_specs=[
                pl.BlockSpec((rows, C), lambda i: (i, 0)),          # x rows
                pl.BlockSpec((C, 3 * C), lambda i: (0, 0),
                             pipeline_mode=invariant),              # w_qkv
                pl.BlockSpec((1, 3 * C), lambda i: (0, 0),
                             pipeline_mode=invariant),              # b_qkv
                pl.BlockSpec((C, C), lambda i: (0, 0),
                             pipeline_mode=invariant),              # w_proj
                pl.BlockSpec((1, C), lambda i: (0, 0),
                             pipeline_mode=invariant),              # b_proj
            ],
            out_specs=pl.BlockSpec((rows, C), lambda i: (i, 0)),
            scratch_shapes=[pltpu.VMEM((rows, C), jnp.bfloat16)],   # head outs
        ),
        compiler_params=pltpu.CompilerParams(
            dimension_semantics=("parallel",),
            vmem_limit_bytes=vmem_limit),
    )(x2, wqkv_bf, bqkv2, wproj_bf, bproj2)

    out = out2.reshape(B, N_pad, C)
    if N_pad != N:
        out = out[:, :N, :]
    return out


def attention_reference(x, w_qkv, b_qkv, w_proj, b_proj, *, n_heads):
    """Pure-JAX (f32) reference matching the PyTorch module semantics."""
    B, N, C = x.shape
    head_dim = C // n_heads
    qkv = jnp.einsum('bnc,cd->bnd', x, w_qkv) + b_qkv          # (B, N, 3C)
    qkv = qkv.reshape(B, N, 3, n_heads, head_dim)
    qkv = jnp.transpose(qkv, (2, 0, 3, 1, 4))                  # (3, B, H, N, Dh)
    q, k, v = qkv[0], qkv[1], qkv[2]
    s = jnp.einsum('bhnd,bhmd->bhnm', q, k) / math.sqrt(head_dim)
    p = jax.nn.softmax(s, axis=-1)
    o = jnp.einsum('bhnm,bhmd->bhnd', p, v)                    # (B, H, N, Dh)
    o = jnp.transpose(o, (0, 2, 1, 3)).reshape(B, N, C)
    return jnp.einsum('bnc,cd->bnd', o, w_proj) + b_proj


if __name__ == "__main__":
    # Small shapes consistent with the module: dim=32, n_heads=4 -> head_dim=8.
    B, N, C = 2, 8, 32
    n_heads = 4

    key = jax.random.PRNGKey(0)
    kx, kw1, kb1, kw2, kb2 = jax.random.split(key, 5)

    x = jax.random.normal(kx, (B, N, C), dtype=jnp.float32)
    w_qkv = jax.random.normal(kw1, (C, 3 * C), dtype=jnp.float32) * 0.05
    b_qkv = jax.random.normal(kb1, (3 * C,), dtype=jnp.float32) * 0.01
    w_proj = jax.random.normal(kw2, (C, C), dtype=jnp.float32) * 0.05
    b_proj = jax.random.normal(kb2, (C,), dtype=jnp.float32) * 0.01

    out = attention_pallas(x, w_qkv, b_qkv, w_proj, b_proj, n_heads=n_heads)
    out = jax.block_until_ready(out)
    ref = attention_reference(x, w_qkv, b_qkv, w_proj, b_proj, n_heads=n_heads)
    assert out.shape == (B, N, C)
    max_err = float(jnp.max(jnp.abs(out - ref)))
    # Tolerance accounts for bf16 MXU operands + approx reciprocal in-kernel.
    assert max_err < 2e-2, f"mismatch vs JAX reference (max abs err {max_err})"

    # Second case: N not a multiple of 8 exercises the padding + key-mask path.
    N2 = 6
    x2 = jax.random.normal(jax.random.PRNGKey(1), (B, N2, C), dtype=jnp.float32)
    out2 = attention_pallas(x2, w_qkv, b_qkv, w_proj, b_proj, n_heads=n_heads)
    out2 = jax.block_until_ready(out2)
    ref2 = attention_reference(x2, w_qkv, b_qkv, w_proj, b_proj, n_heads=n_heads)
    assert out2.shape == (B, N2, C)
    max_err2 = float(jnp.max(jnp.abs(out2 - ref2)))
    assert max_err2 < 2e-2, f"padded-case mismatch (max abs err {max_err2})"

    print("KERNEL_OK")
</pallas_src>

<mosaic_0001>
module attributes {stable_mosaic.version = 11 : i64} {
  func.func @_attention_kernel(%arg0: i32, %arg1: memref<8x32xbf16, #tpu.memory_space<vmem>>, %arg2: memref<32x96xbf16, #tpu.memory_space<vmem>>, %arg3: memref<1x96xf32, #tpu.memory_space<vmem>>, %arg4: memref<32x32xbf16, #tpu.memory_space<vmem>>, %arg5: memref<1x32xf32, #tpu.memory_space<vmem>>, %arg6: memref<8x32xf32, #tpu.memory_space<vmem>>, %arg7: memref<8x32xbf16, #tpu.memory_space<vmem>>) attributes {dimension_semantics = [#tpu.dimension_semantics<parallel>], iteration_bounds = array<i64: 2>, scalar_prefetch = 0 : i64, scratch_operands = 1 : i64, tpu.core_type = #tpu.core_type<tc>, window_params = [{transform_indices = @transform_0, window_bounds = array<i64: 8, 32>}, {pipeline_mode = #tpu.pipeline_mode<synchronous>, transform_indices = @transform_1, window_bounds = array<i64: 32, 96>}, {pipeline_mode = #tpu.pipeline_mode<synchronous>, transform_indices = @transform_2, window_bounds = array<i64: 1, 96>}, {pipeline_mode = #tpu.pipeline_mode<synchronous>, transform_indices = @transform_3, window_bounds = array<i64: 32, 32>}, {pipeline_mode = #tpu.pipeline_mode<synchronous>, transform_indices = @transform_4, window_bounds = array<i64: 1, 32>}, {transform_indices = @transform_5, window_bounds = array<i64: 8, 32>}]} {
    %c0 = arith.constant 0 : index
    %c0_0 = arith.constant 0 : index
    %0 = vector.load %arg1[%c0, %c0_0] : memref<8x32xbf16, #tpu.memory_space<vmem>>, vector<8x32xbf16>
    %c0_1 = arith.constant 0 : index
    %c0_2 = arith.constant 0 : index
    %1 = vector.load %arg2[%c0_1, %c0_2] : memref<32x96xbf16, #tpu.memory_space<vmem>>, vector<32x96xbf16>
    %cst = arith.constant dense<0.000000e+00> : vector<8x96xf32>
    %2 = tpu.matmul %0, %1, %cst {dimension_numbers = #tpu.dot_dimension_numbers<[1], [0], [0], [1], [0, 0, 1, 1], [], []>} : vector<8x32xbf16>, vector<32x96xbf16>, vector<8x96xf32> -> vector<8x96xf32>
    %c0_3 = arith.constant 0 : index
    %c0_4 = arith.constant 0 : index
    %3 = vector.load %arg3[%c0_3, %c0_4] : memref<1x96xf32, #tpu.memory_space<vmem>>, vector<1x96xf32>
    %4 = vector.broadcast %3 : vector<1x96xf32> to vector<8x96xf32>
    %5 = arith.addf %2, %4 : vector<8x96xf32>
    %6 = vector.extract_strided_slice %5 {offsets = [0, 0], sizes = [8, 32], strides = [1, 1]} : vector<8x96xf32> to vector<8x32xf32>
    %cst_5 = arith.constant 0.353553385 : f32
    %7 = vector.broadcast %cst_5 : f32 to vector<8x32xf32>
    %8 = arith.mulf %6, %7 : vector<8x32xf32>
    %9 = arith.truncf %8 : vector<8x32xf32> to vector<8x32xbf16>
    %10 = vector.extract_strided_slice %5 {offsets = [0, 32], sizes = [8, 32], strides = [1, 1]} : vector<8x96xf32> to vector<8x32xf32>
    %11 = arith.truncf %10 : vector<8x32xf32> to vector<8x32xbf16>
    %12 = vector.extract_strided_slice %5 {offsets = [0, 64], sizes = [8, 32], strides = [1, 1]} : vector<8x96xf32> to vector<8x32xf32>
    %13 = arith.truncf %12 : vector<8x32xf32> to vector<8x32xbf16>
    %14 = vector.extract_strided_slice %9 {offsets = [0, 0], sizes = [8, 8], strides = [1, 1]} : vector<8x32xbf16> to vector<8x8xbf16>
    %15 = vector.shape_cast %14 : vector<8x8xbf16> to vector<1x8x8xbf16>
    %16 = vector.extract_strided_slice %11 {offsets = [0, 0], sizes = [8, 8], strides = [1, 1]} : vector<8x32xbf16> to vector<8x8xbf16>
    %17 = vector.shape_cast %16 : vector<8x8xbf16> to vector<1x8x8xbf16>
    %18 = vector.extract_strided_slice %13 {offsets = [0, 0], sizes = [8, 8], strides = [1, 1]} : vector<8x32xbf16> to vector<8x8xbf16>
    %19 = vector.shape_cast %18 : vector<8x8xbf16> to vector<1x8x8xbf16>
    "tpu.trace_start"() <{level = 10 : i32, message = "bnd,bmd->bnm"}> : () -> ()
    %cst_6 = arith.constant dense<0.000000e+00> : vector<1x8x8xf32>
    %20 = tpu.matmul %15, %17, %cst_6 {dimension_numbers = #tpu.dot_dimension_numbers<[2], [2], [1], [1], [0, 0, 0, 1, 1, 1], [0], [0]>} : vector<1x8x8xbf16>, vector<1x8x8xbf16>, vector<1x8x8xf32> -> vector<1x8x8xf32>
    "tpu.trace_stop"() : () -> ()
    %cst_7 = arith.constant dense<0xFF800000> : vector<1x8xf32>
    %21 = vector.multi_reduction <maximumf>, %20, %cst_7 [2] : vector<1x8x8xf32> to vector<1x8xf32>
    %22 = vector.shape_cast %21 : vector<1x8xf32> to vector<1x8x1xf32>
    %23 = vector.broadcast %22 : vector<1x8x1xf32> to vector<1x8x8xf32>
    %24 = arith.subf %20, %23 : vector<1x8x8xf32>
    %25 = math.exp %24 : vector<1x8x8xf32>
    %cst_8 = arith.constant dense<0.000000e+00> : vector<1x8xf32>
    %26 = vector.multi_reduction <add>, %25, %cst_8 [2] : vector<1x8x8xf32> to vector<1x8xf32>
    %27 = vector.shape_cast %26 : vector<1x8xf32> to vector<1x8x1xf32>
    %28 = arith.truncf %25 : vector<1x8x8xf32> to vector<1x8x8xbf16>
    "tpu.trace_start"() <{level = 10 : i32, message = "bnm,bmd->bnd"}> : () -> ()
    %cst_9 = arith.constant dense<0.000000e+00> : vector<1x8x8xf32>
    %29 = tpu.matmul %28, %19, %cst_9 {dimension_numbers = #tpu.dot_dimension_numbers<[2], [1], [1], [2], [0, 0, 0, 1, 1, 2], [0], [0]>} : vector<1x8x8xbf16>, vector<1x8x8xbf16>, vector<1x8x8xf32> -> vector<1x8x8xf32>
    "tpu.trace_stop"() : () -> ()
    %30 = tpu.reciprocal %27 {approx = true} : vector<1x8x1xf32> -> vector<1x8x1xf32>
    %31 = vector.broadcast %30 : vector<1x8x1xf32> to vector<1x8x8xf32>
    %32 = arith.mulf %29, %31 : vector<1x8x8xf32>
    %33 = arith.truncf %32 : vector<1x8x8xf32> to vector<1x8x8xbf16>
    %34 = vector.shape_cast %33 : vector<1x8x8xbf16> to vector<8x8xbf16>
    %35 = vector.extract_strided_slice %9 {offsets = [0, 8], sizes = [8, 8], strides = [1, 1]} : vector<8x32xbf16> to vector<8x8xbf16>
    %36 = vector.shape_cast %35 : vector<8x8xbf16> to vector<1x8x8xbf16>
    %37 = vector.extract_strided_slice %11 {offsets = [0, 8], sizes = [8, 8], strides = [1, 1]} : vector<8x32xbf16> to vector<8x8xbf16>
    %38 = vector.shape_cast %37 : vector<8x8xbf16> to vector<1x8x8xbf16>
    %39 = vector.extract_strided_slice %13 {offsets = [0, 8], sizes = [8, 8], strides = [1, 1]} : vector<8x32xbf16> to vector<8x8xbf16>
    %40 = vector.shape_cast %39 : vector<8x8xbf16> to vector<1x8x8xbf16>
    "tpu.trace_start"() <{level = 10 : i32, message = "bnd,bmd->bnm"}> : () -> ()
    %cst_10 = arith.constant dense<0.000000e+00> : vector<1x8x8xf32>
    %41 = tpu.matmul %36, %38, %cst_10 {dimension_numbers = #tpu.dot_dimension_numbers<[2], [2], [1], [1], [0, 0, 0, 1, 1, 1], [0], [0]>} : vector<1x8x8xbf16>, vector<1x8x8xbf16>, vector<1x8x8xf32> -> vector<1x8x8xf32>
    "tpu.trace_stop"() : () -> ()
    %cst_11 = arith.constant dense<0xFF800000> : vector<1x8xf32>
    %42 = vector.multi_reduction <maximumf>, %41, %cst_11 [2] : vector<1x8x8xf32> to vector<1x8xf32>
    %43 = vector.shape_cast %42 : vector<1x8xf32> to vector<1x8x1xf32>
    %44 = vector.broadcast %43 : vector<1x8x1xf32> to vector<1x8x8xf32>
    %45 = arith.subf %41, %44 : vector<1x8x8xf32>
    %46 = math.exp %45 : vector<1x8x8xf32>
    %cst_12 = arith.constant dense<0.000000e+00> : vector<1x8xf32>
    %47 = vector.multi_reduction <add>, %46, %cst_12 [2] : vector<1x8x8xf32> to vector<1x8xf32>
    %48 = vector.shape_cast %47 : vector<1x8xf32> to vector<1x8x1xf32>
    %49 = arith.truncf %46 : vector<1x8x8xf32> to vector<1x8x8xbf16>
    "tpu.trace_start"() <{level = 10 : i32, message = "bnm,bmd->bnd"}> : () -> ()
    %cst_13 = arith.constant dense<0.000000e+00> : vector<1x8x8xf32>
    %50 = tpu.matmul %49, %40, %cst_13 {dimension_numbers = #tpu.dot_dimension_numbers<[2], [1], [1], [2], [0, 0, 0, 1, 1, 2], [0], [0]>} : vector<1x8x8xbf16>, vector<1x8x8xbf16>, vector<1x8x8xf32> -> vector<1x8x8xf32>
    "tpu.trace_stop"() : () -> ()
    %51 = tpu.reciprocal %48 {approx = true} : vector<1x8x1xf32> -> vector<1x8x1xf32>
    %52 = vector.broadcast %51 : vector<1x8x1xf32> to vector<1x8x8xf32>
    %53 = arith.mulf %50, %52 : vector<1x8x8xf32>
    %54 = arith.truncf %53 : vector<1x8x8xf32> to vector<1x8x8xbf16>
    %55 = vector.shape_cast %54 : vector<1x8x8xbf16> to vector<8x8xbf16>
    %56 = vector.extract_strided_slice %9 {offsets = [0, 16], sizes = [8, 8], strides = [1, 1]} : vector<8x32xbf16> to vector<8x8xbf16>
    %57 = vector.shape_cast %56 : vector<8x8xbf16> to vector<1x8x8xbf16>
    %58 = vector.extract_strided_slice %11 {offsets = [0, 16], sizes = [8, 8], strides = [1, 1]} : vector<8x32xbf16> to vector<8x8xbf16>
    %59 = vector.shape_cast %58 : vector<8x8xbf16> to vector<1x8x8xbf16>
    %60 = vector.extract_strided_slice %13 {offsets = [0, 16], sizes = [8, 8], strides = [1, 1]} : vector<8x32xbf16> to vector<8x8xbf16>
    %61 = vector.shape_cast %60 : vector<8x8xbf16> to vector<1x8x8xbf16>
    "tpu.trace_start"() <{level = 10 : i32, message = "bnd,bmd->bnm"}> : () -> ()
    %cst_14 = arith.constant dense<0.000000e+00> : vector<1x8x8xf32>
    %62 = tpu.matmul %57, %59, %cst_14 {dimension_numbers = #tpu.dot_dimension_numbers<[2], [2], [1], [1], [0, 0, 0, 1, 1, 1], [0], [0]>} : vector<1x8x8xbf16>, vector<1x8x8xbf16>, vector<1x8x8xf32> -> vector<1x8x8xf32>
    "tpu.trace_stop"() : () -> ()
    %cst_15 = arith.constant dense<0xFF800000> : vector<1x8xf32>
    %63 = vector.multi_reduction <maximumf>, %62, %cst_15 [2] : vector<1x8x8xf32> to vector<1x8xf32>
    %64 = vector.shape_cast %63 : vector<1x8xf32> to vector<1x8x1xf32>
    %65 = vector.broadcast %64 : vector<1x8x1xf32> to vector<1x8x8xf32>
    %66 = arith.subf %62, %65 : vector<1x8x8xf32>
    %67 = math.exp %66 : vector<1x8x8xf32>
    %cst_16 = arith.constant dense<0.000000e+00> : vector<1x8xf32>
    %68 = vector.multi_reduction <add>, %67, %cst_16 [2] : vector<1x8x8xf32> to vector<1x8xf32>
    %69 = vector.shape_cast %68 : vector<1x8xf32> to vector<1x8x1xf32>
    %70 = arith.truncf %67 : vector<1x8x8xf32> to vector<1x8x8xbf16>
    "tpu.trace_start"() <{level = 10 : i32, message = "bnm,bmd->bnd"}> : () -> ()
    %cst_17 = arith.constant dense<0.000000e+00> : vector<1x8x8xf32>
    %71 = tpu.matmul %70, %61, %cst_17 {dimension_numbers = #tpu.dot_dimension_numbers<[2], [1], [1], [2], [0, 0, 0, 1, 1, 2], [0], [0]>} : vector<1x8x8xbf16>, vector<1x8x8xbf16>, vector<1x8x8xf32> -> vector<1x8x8xf32>
    "tpu.trace_stop"() : () -> ()
    %72 = tpu.reciprocal %69 {approx = true} : vector<1x8x1xf32> -> vector<1x8x1xf32>
    %73 = vector.broadcast %72 : vector<1x8x1xf32> to vector<1x8x8xf32>
    %74 = arith.mulf %71, %73 : vector<1x8x8xf32>
    %75 = arith.truncf %74 : vector<1x8x8xf32> to vector<1x8x8xbf16>
    %76 = vector.shape_cast %75 : vector<1x8x8xbf16> to vector<8x8xbf16>
    %77 = vector.extract_strided_slice %9 {offsets = [0, 24], sizes = [8, 8], strides = [1, 1]} : vector<8x32xbf16> to vector<8x8xbf16>
    %78 = vector.shape_cast %77 : vector<8x8xbf16> to vector<1x8x8xbf16>
    %79 = vector.extract_strided_slice %11 {offsets = [0, 24], sizes = [8, 8], strides = [1, 1]} : vector<8x32xbf16> to vector<8x8xbf16>
    %80 = vector.shape_cast %79 : vector<8x8xbf16> to vector<1x8x8xbf16>
    %81 = vector.extract_strided_slice %13 {offsets = [0, 24], sizes = [8, 8], strides = [1, 1]} : vector<8x32xbf16> to vector<8x8xbf16>
    %82 = vector.shape_cast %81 : vector<8x8xbf16> to vector<1x8x8xbf16>
    "tpu.trace_start"() <{level = 10 : i32, message = "bnd,bmd->bnm"}> : () -> ()
    %cst_18 = arith.constant dense<0.000000e+00> : vector<1x8x8xf32>
    %83 = tpu.matmul %78, %80, %cst_18 {dimension_numbers = #tpu.dot_dimension_numbers<[2], [2], [1], [1], [0, 0, 0, 1, 1, 1], [0], [0]>} : vector<1x8x8xbf16>, vector<1x8x8xbf16>, vector<1x8x8xf32> -> vector<1x8x8xf32>
    "tpu.trace_stop"() : () -> ()
    %cst_19 = arith.constant dense<0xFF800000> : vector<1x8xf32>
    %84 = vector.multi_reduction <maximumf>, %83, %cst_19 [2] : vector<1x8x8xf32> to vector<1x8xf32>
    %85 = vector.shape_cast %84 : vector<1x8xf32> to vector<1x8x1xf32>
    %86 = vector.broadcast %85 : vector<1x8x1xf32> to vector<1x8x8xf32>
    %87 = arith.subf %83, %86 : vector<1x8x8xf32>
    %88 = math.exp %87 : vector<1x8x8xf32>
    %cst_20 = arith.constant dense<0.000000e+00> : vector<1x8xf32>
    %89 = vector.multi_reduction <add>, %88, %cst_20 [2] : vector<1x8x8xf32> to vector<1x8xf32>
    %90 = vector.shape_cast %89 : vector<1x8xf32> to vector<1x8x1xf32>
    %91 = arith.truncf %88 : vector<1x8x8xf32> to vector<1x8x8xbf16>
    "tpu.trace_start"() <{level = 10 : i32, message = "bnm,bmd->bnd"}> : () -> ()
    %cst_21 = arith.constant dense<0.000000e+00> : vector<1x8x8xf32>
    %92 = tpu.matmul %91, %82, %cst_21 {dimension_numbers = #tpu.dot_dimension_numbers<[2], [1], [1], [2], [0, 0, 0, 1, 1, 2], [0], [0]>} : vector<1x8x8xbf16>, vector<1x8x8xbf16>, vector<1x8x8xf32> -> vector<1x8x8xf32>
    "tpu.trace_stop"() : () -> ()
    %93 = tpu.reciprocal %90 {approx = true} : vector<1x8x1xf32> -> vector<1x8x1xf32>
    %94 = vector.broadcast %93 : vector<1x8x1xf32> to vector<1x8x8xf32>
    %95 = arith.mulf %92, %94 : vector<1x8x8xf32>
    %96 = arith.truncf %95 : vector<1x8x8xf32> to vector<1x8x8xbf16>
    %97 = vector.shape_cast %96 : vector<1x8x8xbf16> to vector<8x8xbf16>
    %98 = tpu.concatenate %34, %55, %76, %97 in 1 : vector<8x8xbf16>, vector<8x8xbf16>, vector<8x8xbf16>, vector<8x8xbf16> -> vector<8x32xbf16>
    %c0_22 = arith.constant 0 : index
    %c0_23 = arith.constant 0 : index
    %99 = vector.load %arg7[%c0_22, %c0_23] : memref<8x32xbf16, #tpu.memory_space<vmem>>, vector<8x32xbf16>
    tpu.vector_store %arg7[%c0_22, %c0_23], %98 {strides = array<i32>} : memref<8x32xbf16, #tpu.memory_space<vmem>>, vector<8x32xbf16>,
    %c0_24 = arith.constant 0 : index
    %c0_25 = arith.constant 0 : index
    %100 = vector.load %arg7[%c0_24, %c0_25] : memref<8x32xbf16, #tpu.memory_space<vmem>>, vector<8x32xbf16>
    %c0_26 = arith.constant 0 : index
    %c0_27 = arith.constant 0 : index
    %101 = vector.load %arg4[%c0_26, %c0_27] : memref<32x32xbf16, #tpu.memory_space<vmem>>, vector<32x32xbf16>
    %cst_28 = arith.constant dense<0.000000e+00> : vector<8x32xf32>
    %102 = tpu.matmul %100, %101, %cst_28 {dimension_numbers = #tpu.dot_dimension_numbers<[1], [0], [0], [1], [0, 0, 1, 1], [], []>} : vector<8x32xbf16>, vector<32x32xbf16>, vector<8x32xf32> -> vector<8x32xf32>
    %c0_29 = arith.constant 0 : index
    %c0_30 = arith.constant 0 : index
    %103 = vector.load %arg5[%c0_29, %c0_30] : memref<1x32xf32, #tpu.memory_space<vmem>>, vector<1x32xf32>
    %104 = vector.broadcast %103 : vector<1x32xf32> to vector<8x32xf32>
    %105 = arith.addf %102, %104 : vector<8x32xf32>
    %c0_31 = arith.constant 0 : index
    %c0_32 = arith.constant 0 : index
    %106 = vector.load %arg6[%c0_31, %c0_32] : memref<8x32xf32, #tpu.memory_space<vmem>>, vector<8x32xf32>
    tpu.vector_store %arg6[%c0_31, %c0_32], %105 {strides = array<i32>} : memref<8x32xf32, #tpu.memory_space<vmem>>, vector<8x32xf32>,
    return
  }
  func.func @transform_0(%arg0: i32) -> (i32, i32) {
    %c0_i32 = arith.constant 0 : i32
    %c0_i32_0 = arith.constant 0 : i32
    return %arg0, %c0_i32 : i32, i32
  }
  func.func @transform_1(%arg0: i32) -> (i32, i32) {
    %c0_i32 = arith.constant 0 : i32
    %c0_i32_0 = arith.constant 0 : i32
    %c0_i32_1 = arith.constant 0 : i32
    return %c0_i32, %c0_i32_0 : i32, i32
  }
  func.func @transform_2(%arg0: i32) -> (i32, i32) {
    %c0_i32 = arith.constant 0 : i32
    %c0_i32_0 = arith.constant 0 : i32
    %c0_i32_1 = arith.constant 0 : i32
    return %c0_i32, %c0_i32_0 : i32, i32
  }
  func.func @transform_3(%arg0: i32) -> (i32, i32) {
    %c0_i32 = arith.constant 0 : i32
    %c0_i32_0 = arith.constant 0 : i32
    %c0_i32_1 = arith.constant 0 : i32
    return %c0_i32, %c0_i32_0 : i32, i32
  }
  func.func @transform_4(%arg0: i32) -> (i32, i32) {
    %c0_i32 = arith.constant 0 : i32
    %c0_i32_0 = arith.constant 0 : i32
    %c0_i32_1 = arith.constant 0 : i32
    return %c0_i32, %c0_i32_0 : i32, i32
  }
  func.func @transform_5(%arg0: i32) -> (i32, i32) {
    %c0_i32 = arith.constant 0 : i32
    %c0_i32_0 = arith.constant 0 : i32
    return %arg0, %c0_i32 : i32, i32
  }
}

</mosaic_0001>

<llo_original>
// kernel: tpu_custom_call.1
$region0: #{tpu_custom_call.1}
  #allocation0 [shape = 'u32[]', space=smem, size = 0x4, offset = 0x4, fixed_abs, tag = 'smem constant byte address 0x4 - core index']
  #allocation1 [shape = 'u32[72,128]{1,0:T(1,128)}', space=vmem, size = 0x9000, scoped, tag = 'internal scratch']
  #allocation2 [shape = 'bf16[8,32]{1,0:T(8,128)(2,1)}', space=vmem, size = 0x800, scoped, tag = 'scratch operand']
  %s0 = inlined_call_operand.hbm [shape: bf16[16,32], index: 0, kind: input, shape index: {}]
  %s1 = inlined_call_operand.hbm [shape: bf16[32,96], index: 1, kind: input, shape index: {}]
  %s2 = inlined_call_operand.vmem [shape: f32[1,96], index: 2, kind: input, shape index: {}]
  %s3 = inlined_call_operand.hbm [shape: bf16[32,32], index: 3, kind: input, shape index: {}]
  %s4 = inlined_call_operand.vmem [shape: f32[1,32], index: 4, kind: input, shape index: {}]
  %s5 = inlined_call_operand.hbm [shape: f32[16,32], index: 5, kind: output, shape index: {}]
  %s6 = sld [smem:[#allocation0]]
  $region65: #{tpu_custom_call.1} parent=0
    _
  %s8 = ssub.s32 1, %s6
  %s9 = scalar_select 0, %s8, %s6
  $region1: #{tpu_custom_call.1} parent=0
    #allocation3 [shape = 'u8[4096]{0}', space=vmem, size = 0x1000, scoped, tag = 'input window, operand 0']
    #allocation4 [shape = 's32[2]{0}', space=sflag, size = 0x8, scoped, tag = 'scoped memory for tpu_custom_call.1']
    #allocation5 [shape = 's32[2]{0}', space=sflag, size = 0x8, scoped, tag = 'scoped memory for tpu_custom_call.1']
    #allocation6 [shape = 'u8[8192]{0}', space=vmem, size = 0x2000, scoped, tag = 'input window, operand 1, single buffered']
    #allocation7 [shape = 's32[1]{0}', space=sflag, size = 0x4, scoped, tag = 'scoped memory for tpu_custom_call.1']
    #allocation8 [shape = 'u8[8192]{0}', space=vmem, size = 0x2000, scoped, tag = 'input window, operand 3, single buffered']
    #allocation9 [shape = 'u8[8192]{0}', space=vmem, size = 0x2000, scoped, tag = 'output window, operand 0']
    %10 = vsyncpa [#allocation4], 0
    %s11 = scalar_lea.sflag [#allocation4], 1
    %12 = vsyncpa %s11, 0
    %13 = vsyncpa [#allocation7], 0
    %14 = vsyncpa [#allocation5], 0
    %s15 = scalar_lea.sflag [#allocation5], 1
    %16 = vsyncpa %s15, 0
    loop: start=0, step=1, limit=4
    $region2: #{tpu_custom_call.1} parent=1 // loop_pre_header
      _
    $region3: #{tpu_custom_call.1} parent=1 // loop_header
      %s18 = sphi 0, %s22
      %p19 = scmp.ge.s32.totalorder %s18, 4
      %s28 = sphi 0, %s30
      %s31 = sphi 0, %s28
      %s32 = sphi 0, %s31
      %s48 = sphi 0, %s32
      %s52 = sphi 0, %s52
      %s54 = sphi 0, %s52
      %s55 = sphi 0, %s54
      %s69 = sphi 0, %s55
      %s73 = sphi 0, %s73
      %s75 = sphi 0, %s73
      %s76 = sphi 0, %s75
      %s90 = sphi 0, %s76
      %s94 = sphi 0, %s94
      %s96 = sphi 0, %s94
      %s97 = sphi 0, %s96
      %s111 = sphi 0, %s97
      %s115 = sphi 0, %s115
      %s117 = sphi 0, %s115
      %s118 = sphi 0, %s117
      %s132 = sphi 0, %s118
      %s138 = sphi 0, %s140
      %s141 = sphi 0, %s138
      %s142 = sphi 0, %s141
      %s158 = sphi 0, %s142
    $region4: #{tpu_custom_call.1} parent=1 // loop_header_branch
      %21 = sbr.rel (%p19) target = $region8
    $region5: #{tpu_custom_call.1} parent=1 // loop_body
      %s23 = ssub.s32 %s18, 1
      %s24 = ssub.s32 %s18, 2
      %s25 = sadd.s32 %s18, 1
      %s26 = ssub.s32 %s18, %s25
      %p27 = scmp.eq.s32.totalorder %s26, 0
      %s29 = sadd.s32 %s28, 1
      %s30 = scalar_select %p27, %s28, %s29
      %p33 = pneg %p27
      %p34 = scmp.eq.s32.totalorder %s18, 1
      %p35 = por %p33, %p34
      %p36 = scmp.ne.s32.totalorder %s28, %s31
      %p37 = scmp.eq.s32.totalorder %s18, 0
      %p38 = por %p36, %p37
      %p39 = scmp.ne.s32.totalorder %s28, %s31
      %p40 = scmp.eq.s32.totalorder %s23, 1
      %p41 = por %p39, %p40
      %p42 = scmp.ne.s32.totalorder %s31, %s32
      %p43 = scmp.eq.s32.totalorder %s23, 0
      %p44 = por %p42, %p43
      %p45 = scmp.ne.s32.totalorder %s31, %s32
      %p46 = scmp.eq.s32.totalorder %s24, 1
      %p47 = por %p45, %p46
      %p49 = scmp.ne.s32.totalorder %s32, %s48
      %p50 = scmp.eq.s32.totalorder %s24, 0
      %p51 = por %p49, %p50
      %s53 = sadd.s32 %s52, 1
      %p56 = scmp.eq.s32.totalorder %s18, 1
      %p57 = scmp.ne.s32.totalorder %s52, %s54
      %p58 = scmp.eq.s32.totalorder %s18, 0
      %p59 = por %p57, %p58
      %p60 = scmp.ne.s32.totalorder %s52, %s54
      %p61 = scmp.eq.s32.totalorder %s23, 1
      %p62 = por %p60, %p61
      %p63 = scmp.ne.s32.totalorder %s54, %s55
      %p64 = scmp.eq.s32.totalorder %s23, 0
      %p65 = por %p63, %p64
      %p66 = scmp.ne.s32.totalorder %s54, %s55
      %p67 = scmp.eq.s32.totalorder %s24, 1
      %p68 = por %p66, %p67
      %p70 = scmp.ne.s32.totalorder %s55, %s69
      %p71 = scmp.eq.s32.totalorder %s24, 0
      %p72 = por %p70, %p71
      %s74 = sadd.s32 %s73, 1
      %p77 = scmp.eq.s32.totalorder %s18, 1
      %p78 = scmp.ne.s32.totalorder %s73, %s75
      %p79 = scmp.eq.s32.totalorder %s18, 0
      %p80 = por %p78, %p79
      %p81 = scmp.ne.s32.totalorder %s73, %s75
      %p82 = scmp.eq.s32.totalorder %s23, 1
      %p83 = por %p81, %p82
      %p84 = scmp.ne.s32.totalorder %s75, %s76
      %p85 = scmp.eq.s32.totalorder %s23, 0
      %p86 = por %p84, %p85
      %p87 = scmp.ne.s32.totalorder %s75, %s76
      %p88 = scmp.eq.s32.totalorder %s24, 1
      %p89 = por %p87, %p88
      %p91 = scmp.ne.s32.totalorder %s76, %s90
      %p92 = scmp.eq.s32.totalorder %s24, 0
      %p93 = por %p91, %p92
      %s95 = sadd.s32 %s94, 1
      %p98 = scmp.eq.s32.totalorder %s18, 1
      %p99 = scmp.ne.s32.totalorder %s94, %s96
      %p100 = scmp.eq.s32.totalorder %s18, 0
      %p101 = por %p99, %p100
      %p102 = scmp.ne.s32.totalorder %s94, %s96
      %p103 = scmp.eq.s32.totalorder %s23, 1
      %p104 = por %p102, %p103
      %p105 = scmp.ne.s32.totalorder %s96, %s97
      %p106 = scmp.eq.s32.totalorder %s23, 0
      %p107 = por %p105, %p106
      %p108 = scmp.ne.s32.totalorder %s96, %s97
      %p109 = scmp.eq.s32.totalorder %s24, 1
      %p110 = por %p108, %p109
      %p112 = scmp.ne.s32.totalorder %s97, %s111
      %p113 = scmp.eq.s32.totalorder %s24, 0
      %p114 = por %p112, %p113
      %s116 = sadd.s32 %s115, 1
      %p119 = scmp.eq.s32.totalorder %s18, 1
      %p120 = scmp.ne.s32.totalorder %s115, %s117
      %p121 = scmp.eq.s32.totalorder %s18, 0
      %p122 = por %p120, %p121
      %p123 = scmp.ne.s32.totalorder %s115, %s117
      %p124 = scmp.eq.s32.totalorder %s23, 1
      %p125 = por %p123, %p124
      %p126 = scmp.ne.s32.totalorder %s117, %s118
      %p127 = scmp.eq.s32.totalorder %s23, 0
      %p128 = por %p126, %p127
      %p129 = scmp.ne.s32.totalorder %s117, %s118
      %p130 = scmp.eq.s32.totalorder %s24, 1
      %p131 = por %p129, %p130
      %p133 = scmp.ne.s32.totalorder %s118, %s132
      %p134 = scmp.eq.s32.totalorder %s24, 0
      %p135 = por %p133, %p134
      %s136 = ssub.s32 %s18, %s25
      %p137 = scmp.eq.s32.totalorder %s136, 0
      %s139 = sadd.s32 %s138, 1
      %s140 = scalar_select %p137, %s138, %s139
      %p143 = pneg %p137
      %p144 = scmp.eq.s32.totalorder %s18, 1
      %p145 = por %p143, %p144
      %p146 = scmp.ne.s32.totalorder %s138, %s141
      %p147 = scmp.eq.s32.totalorder %s18, 0
      %p148 = por %p146, %p147
      %p149 = scmp.ne.s32.totalorder %s138, %s141
      %p150 = scmp.eq.s32.totalorder %s23, 1
      %p151 = por %p149, %p150
      %p152 = scmp.ne.s32.totalorder %s141, %s142
      %p153 = scmp.eq.s32.totalorder %s23, 0
      %p154 = por %p152, %p153
      %p155 = scmp.ne.s32.totalorder %s141, %s142
      %p156 = scmp.eq.s32.totalorder %s24, 1
      %p157 = por %p155, %p156
      %p159 = scmp.ne.s32.totalorder %s142, %s158
      %p160 = scmp.eq.s32.totalorder %s24, 0
      %p161 = por %p159, %p160
      %p162 = scmp.le.s32.totalorder 1, %s18
      %p163 = scmp.lt.s32.totalorder %s18, 3
      %p164 = pnand %p162, %p163
      %p165 = pneg %p164
      // Predicated region
      $region9: #{tpu_custom_call.1} parent=5 // pred_check
        _
      $region10: #{tpu_custom_call.1} parent=5 // pred_check_branch
        %167 = sbr.rel (%p164) target = $region12
      $region11: #{tpu_custom_call.1} parent=5 // pred_region
        %s168 = ssub.s32 %s18, 1
        // Predicated region
        $region13: #{tpu_custom_call.1} parent=11 // pred_check
          %p169 = pneg %p65
        $region14: #{tpu_custom_call.1} parent=11 // pred_check_branch
          %171 = sbr.rel (%p169) target = $region16
        $region15: #{tpu_custom_call.1} parent=11 // pred_region
          %173 = vsyncadd [#allocation7], 0
          %s174 = sshll.u32 %s1, 4
          %s175 = int_to_ptr.hbm [resolvable:$true] %s174
          %s176 = sshll.u32 [#allocation6], 4
          %s177 = int_to_ptr.vmem [resolvable:$true] %s176
          %182 = dma.hbm_to_vmem [thread:$0]  %s175, 256, %s177, [#allocation7], 64, 64, 4
        $region16: #{tpu_custom_call.1} parent=11 // pred_fallthru
          _
        // Predicated region
        $region17: #{tpu_custom_call.1} parent=11 // pred_check
          %p183 = pneg %p86
        $region18: #{tpu_custom_call.1} parent=11 // pred_check_branch
          %185 = sbr.rel (%p183) target = $region20
        $region19: #{tpu_custom_call.1} parent=11 // pred_region
          _
        $region20: #{tpu_custom_call.1} parent=11 // pred_fallthru
          _
        // Predicated region
        $region21: #{tpu_custom_call.1} parent=11 // pred_check
          %p186 = pneg %p107
        $region22: #{tpu_custom_call.1} parent=11 // pred_check_branch
          %188 = sbr.rel (%p186) target = $region24
        $region23: #{tpu_custom_call.1} parent=11 // pred_region
          %190 = vsyncadd [#allocation7], 0
          %s191 = sshll.u32 %s3, 4
          %s192 = int_to_ptr.hbm [resolvable:$true] %s191
          %s193 = sshll.u32 [#allocation8], 4
          %s194 = int_to_ptr.vmem [resolvable:$true] %s193
          %199 = dma.hbm_to_vmem [thread:$0]  %s192, 256, %s194, [#allocation7], 64, 64, 4
        $region24: #{tpu_custom_call.1} parent=11 // pred_fallthru
          _
        // Predicated region
        $region25: #{tpu_custom_call.1} parent=11 // pred_check
          %p200 = pneg %p128
        $region26: #{tpu_custom_call.1} parent=11 // pred_check_branch
          %202 = sbr.rel (%p200) target = $region28
        $region27: #{tpu_custom_call.1} parent=11 // pred_region
          _
        $region28: #{tpu_custom_call.1} parent=11 // pred_fallthru
          _
      $region12: #{tpu_custom_call.1} parent=5 // pred_fallthru
        _
      %p203 = scmp.lt.s32.totalorder %s18, 2
      // Predicated region
      $region29: #{tpu_custom_call.1} parent=5 // pred_check
        %p204 = pneg %p203
      $region30: #{tpu_custom_call.1} parent=5 // pred_check_branch
        %206 = sbr.rel (%p204) target = $region32
      $region31: #{tpu_custom_call.1} parent=5 // pred_region
        // Predicated region
        $region33: #{tpu_custom_call.1} parent=31 // pred_check
          %p207 = pneg %p38
        $region34: #{tpu_custom_call.1} parent=31 // pred_check_branch
          %209 = sbr.rel (%p207) target = $region36
        $region35: #{tpu_custom_call.1} parent=31 // pred_region
          %s210 = sand.u32 %s28, 1
          %s211 = scalar_lea.sflag [#allocation4], %s210
          %s212 = sand.u32 %s28, 1
          %s213 = smul.addr %s212, 4
          %s214 = scalar_lea.vmem [#allocation3], %s213
          %216 = vsyncadd %s211, 0
          %s217 = smul.addr %s18, 4
          %s218 = scalar_lea.hbm %s0, %s217
          %s220 = sshll.u32 %s218, 4
          %s221 = int_to_ptr.hbm [resolvable:$true] %s220
          %s222 = sshll.u32 %s214, 4
          %s223 = int_to_ptr.vmem [resolvable:$true] %s222
          %225 = dma.hbm_to_vmem [thread:$0]  %s221, 64, %s223, %s211
        $region36: #{tpu_custom_call.1} parent=31 // pred_fallthru
          _
      $region32: #{tpu_custom_call.1} parent=5 // pred_fallthru
        _
      %p226 = scmp.le.s32.totalorder 1, %s18
      %p227 = scmp.lt.s32.totalorder %s18, 3
      %p228 = pnand %p226, %p227
      %p229 = pneg %p228
      // Predicated region
      $region37: #{tpu_custom_call.1} parent=5 // pred_check
        _
      $region38: #{tpu_custom_call.1} parent=5 // pred_check_branch
        %231 = sbr.rel (%p228) target = $region40
      $region39: #{tpu_custom_call.1} parent=5 // pred_region
        %s232 = ssub.s32 %s18, 1
        %s233 = sand.u32 %s31, 1
        %s234 = scalar_lea.sflag [#allocation4], %s233
        %s235 = sand.u32 %s31, 1
        %s236 = smul.addr %s235, 4
        %s237 = scalar_lea.vmem [#allocation3], %s236
        // Predicated region
        $region41: #{tpu_custom_call.1} parent=39 // pred_check
          %p238 = pneg %p44
        $region42: #{tpu_custom_call.1} parent=39 // pred_check_branch
          %240 = sbr.rel (%p238) target = $region44
        $region43: #{tpu_custom_call.1} parent=39 // pred_region
          %242 = dma.done %s234, 64
        $region44: #{tpu_custom_call.1} parent=39 // pred_fallthru
          _
        // Predicated region
        $region45: #{tpu_custom_call.1} parent=39 // pred_check
          %p243 = pneg %p65
        $region46: #{tpu_custom_call.1} parent=39 // pred_check_branch
          %245 = sbr.rel (%p243) target = $region48
        $region47: #{tpu_custom_call.1} parent=39 // pred_region
          %247 = dma.done [#allocation7], 256
        $region48: #{tpu_custom_call.1} parent=39 // pred_fallthru
          _
        // Predicated region
        $region49: #{tpu_custom_call.1} parent=39 // pred_check
          %p248 = pneg %p107
        $region50: #{tpu_custom_call.1} parent=39 // pred_check_branch
          %250 = sbr.rel (%p248) target = $region52
        $region51: #{tpu_custom_call.1} parent=39 // pred_region
          %252 = dma.done [#allocation7], 256
        $region52: #{tpu_custom_call.1} parent=39 // pred_fallthru
          _
        %s253 = sand.u32 %s31, 1
        %s254 = scalar_lea.sflag [#allocation4], %s253
        %s255 = sand.u32 %s31, 1
        %s256 = smul.addr %s255, 4
        %s257 = scalar_lea.vmem [#allocation3], %s256
        %p258 = pneg %p44
        %p259 = pneg %p41
        %p260 = pneg %p65
        %p261 = pneg %p62
        %p262 = pneg %p86
        %p263 = pneg %p83
        %p264 = pneg %p107
        %p265 = pneg %p104
        %p266 = pneg %p128
        %p267 = pneg %p125
        %p268 = pneg %p154
        %p269 = pneg %p151
        %s270 = sand.u32 %s141, 1
        %s271 = scalar_lea.sflag [#allocation5], %s270
        %s272 = sand.u32 %s141, 1
        %s273 = smul.addr %s272, 8
        %s274 = scalar_lea.vmem [#allocation9], %s273
        %v276 = vld [vmem:[%s237] sm:$0xf]
        %v277 = vld [vmem:[#allocation6] sm:$0xf]
        %v278 = vld [vmem:[#allocation6 + $0x4] sm:$0xf]
        %v279 = vld [vmem:[#allocation6 + $0x8] sm:$0xf]
        %v280 = vld [vmem:[#allocation6 + $0xc] sm:$0xf]
        %v281 = vld [vmem:[%s2] sm:$0x1]
        %v283 = vperm.slane %v281, 0
        %v289 = vunpack.c.l.b16 %v277
        %v290 = vunpack.c.l.b16 %v278
        %v291 = vunpack.c.l.b16 %v279
        %v292 = vunpack.c.l.b16 %v280
        %v293 = vpack.c.b16 %v290, %v289
        %v294 = vpack.c.b16 %v292, %v291
        %vm297 = vcmask 261120
        %v299 = vsel %vm297, %v276, 0
        %301 = vmatpush.bf16.msra.mxu0 0
        %302 = vmatpush.bf16.msra.mxu0 0
        %303 = vmatpush.bf16.msra.mxu0 0
        %304 = vmatpush.bf16.msra.mxu0 0
        %305 = vmatpush.bf16.msra.mxu0 0
        %306 = vmatpush.bf16.msra.mxu0 0
        %307 = vmatpush.bf16.msra.mxu0 %v294
        %308 = vmatpush.bf16.msra.mxu0 %v293
        %309 = vmatmul.bf16.gmra.mxu0 %v299
        %v310 = vpop.f32.mrf.mxu0
        %v311 = vadd.f32 %v283, %v310
        %v312 = vpop.f32.mrf.mxu0
        %313 = vdwg.mxu0
        %v314 = vmul.f32 %v311, 0.35355338
        %v315 = vpack.c.bf16 %v314, %v314
        %v316 = vpack.c.bf16 %v311, %v311
        %v318 = vunpack.c.l.b16 %v316
        %v319 = vpack.c.b16 %v318, %v318
        %320 = vrot.lane.b32.xlu0 %v319, 96
        %v321 = vpop.permute.xlu0 %320
        %vm322 = vcmask 64512
        %v324 = vsel %vm322, %v315, 0
        %v327 = vsel %vm322, %v321, 0
        %329 = vmatpush.bf16.xpose.msra.mxu0 0
        %330 = vmatpush.bf16.xpose.msra.mxu0 0
        %331 = vmatpush.bf16.xpose.msra.mxu0 0
        %332 = vmatpush.bf16.xpose.msra.mxu0 0
        %333 = vmatpush.bf16.xpose.msra.mxu0 0
        %334 = vmatpush.bf16.xpose.msra.mxu0 0
        %335 = vmatpush.bf16.xpose.msra.mxu0 0
        %336 = vmatpush.bf16.xpose.msra.mxu0 %v327
        %337 = vmatmul.bf16.gmra.mxu0 %v324
        %v338 = vpop.f32.mrf.mxu0
        %v339 = vadd.f32 0.0, %v338
        %v340 = vpop.f32.mrf.mxu0
        %341 = vdwg.mxu0
        %v342 = vsel %vm322, %v339, -inf
        %343 = vmax.xlane.f32.xlu0 %v342
        %v344 = vpop.xlane.xlu0 %343
        %v345 = vsub.f32 %v339, %v344
        %v346 = vmul.f32 %v345, 1.442695
        %v347 = vpow.pop %v346
        %v348 = vsel %vm322, %v347, 0.0
        %349 = vadd.xlane.f32.xlu0 %v348
        %v350 = vpop.xlane.xlu0 %349
        %v351 = vpack.c.bf16 %v347, %v347
        %352 = vrot.lane.b32.xlu0 %v319, 64
        %v353 = vpop.permute.xlu0 %352
        %v355 = vsel %vm322, %v351, 0
        %vm357 = vcmask 1043456
        %v359 = vsel %vm357, %v353, 0
        %361 = vmatpush.bf16.msra.mxu0 0
        %362 = vmatpush.bf16.msra.mxu0 0
        %363 = vmatpush.bf16.msra.mxu0 0
        %364 = vmatpush.bf16.msra.mxu0 0
        %365 = vmatpush.bf16.msra.mxu0 0
        %366 = vmatpush.bf16.msra.mxu0 0
        %367 = vmatpush.bf16.msra.mxu0 0
        %368 = vmatpush.bf16.msra.mxu0 %v359
        %369 = vmatmul.bf16.gmra.mxu0 %v355
        %v370 = vpop.f32.mrf.mxu0
        %v371 = vadd.f32 0.0, %v370
        %v372 = vpop.f32.mrf.mxu0
        %373 = vdwg.mxu0
        %v374 = vrcp.pop %v350
        %v375 = vmul.f32 %v371, %v374
        %v376 = vpack.c.bf16 %v375, %v375
        %v378 = vunpack.c.l.b16 %v315
        %v379 = vpack.c.b16 %v378, %v378
        %380 = vrot.lane.b32.xlu0 %v379, 120
        %v381 = vpop.permute.xlu0 %380
        %382 = vrot.lane.b32.xlu0 %v319, 88
        %v383 = vpop.permute.xlu0 %382
        %v385 = vsel %vm322, %v381, 0
        %v388 = vsel %vm322, %v383, 0
        %390 = vmatpush.bf16.xpose.msra.mxu0 0
        %391 = vmatpush.bf16.xpose.msra.mxu0 0
        %392 = vmatpush.bf16.xpose.msra.mxu0 0
        %393 = vmatpush.bf16.xpose.msra.mxu0 0
        %394 = vmatpush.bf16.xpose.msra.mxu0 0
        %395 = vmatpush.bf16.xpose.msra.mxu0 0
        %396 = vmatpush.bf16.xpose.msra.mxu0 0
        %397 = vmatpush.bf16.xpose.msra.mxu0 %v388
        %398 = vmatmul.bf16.gmra.mxu0 %v385
        %v399 = vpop.f32.mrf.mxu0
        %v400 = vadd.f32 0.0, %v399
        %v401 = vpop.f32.mrf.mxu0
        %402 = vdwg.mxu0
        %v403 = vsel %vm322, %v400, -inf
        %404 = vmax.xlane.f32.xlu0 %v403
        %v405 = vpop.xlane.xlu0 %404
        %v406 = vsub.f32 %v400, %v405
        %v407 = vmul.f32 %v406, 1.442695
        %v408 = vpow.pop %v407
        %v409 = vsel %vm322, %v408, 0.0
        %410 = vadd.xlane.f32.xlu0 %v409
        %v411 = vpop.xlane.xlu0 %410
        %v412 = vpack.c.bf16 %v408, %v408
        %413 = vrot.lane.b32.xlu0 %v319, 56
        %v414 = vpop.permute.xlu0 %413
        %v416 = vsel %vm322, %v412, 0
        %v419 = vsel %vm357, %v414, 0
        %421 = vmatpush.bf16.msra.mxu0 0
        %422 = vmatpush.bf16.msra.mxu0 0
        %423 = vmatpush.bf16.msra.mxu0 0
        %424 = vmatpush.bf16.msra.mxu0 0
        %425 = vmatpush.bf16.msra.mxu0 0
        %426 = vmatpush.bf16.msra.mxu0 0
        %427 = vmatpush.bf16.msra.mxu0 0
        %428 = vmatpush.bf16.msra.mxu0 %v419
        %429 = vmatmul.bf16.gmra.mxu0 %v416
        %v430 = vpop.f32.mrf.mxu0
        %v431 = vadd.f32 0.0, %v430
        %v432 = vpop.f32.mrf.mxu0
        %433 = vdwg.mxu0
        %v434 = vrcp.pop %v411
        %v435 = vmul.f32 %v431, %v434
        %v436 = vpack.c.bf16 %v435, %v435
        %437 = vrot.lane.b32.xlu0 %v379, 112
        %v438 = vpop.permute.xlu0 %437
        %439 = vrot.lane.b32.xlu0 %v319, 80
        %v440 = vpop.permute.xlu0 %439
        %v442 = vsel %vm322, %v438, 0
        %v445 = vsel %vm322, %v440, 0
        %447 = vmatpush.bf16.xpose.msra.mxu0 0
        %448 = vmatpush.bf16.xpose.msra.mxu0 0
        %449 = vmatpush.bf16.xpose.msra.mxu0 0
        %450 = vmatpush.bf16.xpose.msra.mxu0 0
        %451 = vmatpush.bf16.xpose.msra.mxu0 0
        %452 = vmatpush.bf16.xpose.msra.mxu0 0
        %453 = vmatpush.bf16.xpose.msra.mxu0 0
        %454 = vmatpush.bf16.xpose.msra.mxu0 %v445
        %455 = vmatmul.bf16.gmra.mxu0 %v442
        %v456 = vpop.f32.mrf.mxu0
        %v457 = vadd.f32 0.0, %v456
        %v458 = vpop.f32.mrf.mxu0
        %459 = vdwg.mxu0
        %v460 = vsel %vm322, %v457, -inf
        %461 = vmax.xlane.f32.xlu0 %v460
        %v462 = vpop.xlane.xlu0 %461
        %v463 = vsub.f32 %v457, %v462
        %v464 = vmul.f32 %v463, 1.442695
        %v465 = vpow.pop %v464
        %v466 = vsel %vm322, %v465, 0.0
        %467 = vadd.xlane.f32.xlu0 %v466
        %v468 = vpop.xlane.xlu0 %467
        %v469 = vpack.c.bf16 %v465, %v465
        %470 = vrot.lane.b32.xlu0 %v319, 48
        %v471 = vpop.permute.xlu0 %470
        %v473 = vsel %vm322, %v469, 0
        %v476 = vsel %vm357, %v471, 0
        %478 = vmatpush.bf16.msra.mxu0 0
        %479 = vmatpush.bf16.msra.mxu0 0
        %480 = vmatpush.bf16.msra.mxu0 0
        %481 = vmatpush.bf16.msra.mxu0 0
        %482 = vmatpush.bf16.msra.mxu0 0
        %483 = vmatpush.bf16.msra.mxu0 0
        %484 = vmatpush.bf16.msra.mxu0 0
        %485 = vmatpush.bf16.msra.mxu0 %v476
        %486 = vmatmul.bf16.gmra.mxu0 %v473
        %v487 = vpop.f32.mrf.mxu0
        %v488 = vadd.f32 0.0, %v487
        %v489 = vpop.f32.mrf.mxu0
        %490 = vdwg.mxu0
        %v491 = vrcp.pop %v468
        %v492 = vmul.f32 %v488, %v491
        %v493 = vpack.c.bf16 %v492, %v492
        %494 = vrot.lane.b32.xlu0 %v379, 104
        %v495 = vpop.permute.xlu0 %494
        %496 = vrot.lane.b32.xlu0 %v319, 72
        %v497 = vpop.permute.xlu0 %496
        %v499 = vsel %vm322, %v495, 0
        %v502 = vsel %vm322, %v497, 0
        %504 = vmatpush.bf16.xpose.msra.mxu0 0
        %505 = vmatpush.bf16.xpose.msra.mxu0 0
        %506 = vmatpush.bf16.xpose.msra.mxu0 0
        %507 = vmatpush.bf16.xpose.msra.mxu0 0
        %508 = vmatpush.bf16.xpose.msra.mxu0 0
        %509 = vmatpush.bf16.xpose.msra.mxu0 0
        %510 = vmatpush.bf16.xpose.msra.mxu0 0
        %511 = vmatpush.bf16.xpose.msra.mxu0 %v502
        %512 = vmatmul.bf16.gmra.mxu0 %v499
        %v513 = vpop.f32.mrf.mxu0
        %v514 = vadd.f32 0.0, %v513
        %v515 = vpop.f32.mrf.mxu0
        %516 = vdwg.mxu0
        %v517 = vsel %vm322, %v514, -inf
        %518 = vmax.xlane.f32.xlu0 %v517
        %v519 = vpop.xlane.xlu0 %518
        %v520 = vsub.f32 %v514, %v519
        %v521 = vmul.f32 %v520, 1.442695
        %v522 = vpow.pop %v521
        %v523 = vsel %vm322, %v522, 0.0
        %524 = vadd.xlane.f32.xlu0 %v523
        %v525 = vpop.xlane.xlu0 %524
        %v526 = vpack.c.bf16 %v522, %v522
        %527 = vrot.lane.b32.xlu0 %v319, 40
        %v528 = vpop.permute.xlu0 %527
        %v530 = vsel %vm322, %v526, 0
        %v533 = vsel %vm357, %v528, 0
        %535 = vmatpush.bf16.msra.mxu0 0
        %536 = vmatpush.bf16.msra.mxu0 0
        %537 = vmatpush.bf16.msra.mxu0 0
        %538 = vmatpush.bf16.msra.mxu0 0
        %539 = vmatpush.bf16.msra.mxu0 0
        %540 = vmatpush.bf16.msra.mxu0 0
        %541 = vmatpush.bf16.msra.mxu0 0
        %542 = vmatpush.bf16.msra.mxu0 %v533
        %543 = vmatmul.bf16.gmra.mxu0 %v530
        %v544 = vpop.f32.mrf.mxu0
        %v545 = vadd.f32 0.0, %v544
        %v546 = vpop.f32.mrf.mxu0
        %547 = vdwg.mxu0
        %v548 = vrcp.pop %v525
        %v549 = vmul.f32 %v545, %v548
        %v550 = vpack.c.bf16 %v549, %v549
        %v552 = vunpack.c.l.b16 %v436
        %v553 = vpack.c.b16 %v552, %v552
        %554 = vrot.lane.b32.xlu0 %v553, 8
        %v555 = vpop.permute.xlu0 %554
        %v557 = vunpack.c.l.b16 %v493
        %v558 = vpack.c.b16 %v557, %v557
        %559 = vrot.lane.b32.xlu0 %v558, 16
        %v560 = vpop.permute.xlu0 %559
        %v562 = vunpack.c.l.b16 %v550
        %v563 = vpack.c.b16 %v562, %v562
        %564 = vrot.lane.b32.xlu0 %v563, 24
        %v565 = vpop.permute.xlu0 %564
        %v568 = vsel %vm322, %v376, %v555
        %vm569 = vcmask 130048
        %v571 = vsel %vm569, %v568, %v560
        %vm572 = vcmask 195584
        %v574 = vsel %vm572, %v571, %v565
        %vm576 = vcmask 257024
        %577 = vst.msk [vmem:[#allocation2] sm:$0xf] %vm576, %v574
        %v578 = vld [vmem:[#allocation2] sm:$0xf]
        %v579 = vld [vmem:[#allocation8] sm:$0xf]
        %v580 = vld [vmem:[#allocation8 + $0x4] sm:$0xf]
        %v581 = vld [vmem:[#allocation8 + $0x8] sm:$0xf]
        %v582 = vld [vmem:[#allocation8 + $0xc] sm:$0xf]
        %v583 = vld [vmem:[%s4] sm:$0x1]
        %v585 = vperm.slane %v583, 0
        %v591 = vunpack.c.l.b16 %v579
        %v592 = vunpack.c.l.b16 %v580
        %v593 = vunpack.c.l.b16 %v581
        %v594 = vunpack.c.l.b16 %v582
        %v595 = vpack.c.b16 %v592, %v591
        %v596 = vpack.c.b16 %v594, %v593
        %v600 = vsel %vm297, %v578, 0
        %602 = vmatpush.bf16.msra.mxu0 0
        %603 = vmatpush.bf16.msra.mxu0 0
        %604 = vmatpush.bf16.msra.mxu0 0
        %605 = vmatpush.bf16.msra.mxu0 0
        %606 = vmatpush.bf16.msra.mxu0 0
        %607 = vmatpush.bf16.msra.mxu0 0
        %608 = vmatpush.bf16.msra.mxu0 %v596
        %609 = vmatpush.bf16.msra.mxu0 %v595
        %610 = vmatmul.bf16.gmra.mxu0 %v600
        %v611 = vpop.f32.mrf.mxu0
        %v612 = vadd.f32 %v585, %v611
        %v613 = vpop.f32.mrf.mxu0
        %614 = vdwg.mxu0
        %615 = vst.msk [vmem:[%s274] sm:$0xff] %vm297, %v612
        %s616 = sand.u32 %s141, 1
        %s617 = scalar_lea.sflag [#allocation5], %s616
        %s618 = sand.u32 %s141, 1
        %s619 = smul.addr %s618, 8
        %s620 = scalar_lea.vmem [#allocation9], %s619
        // Predicated region
        $region53: #{tpu_custom_call.1} parent=39 // pred_check
          %p621 = pneg %p151
        $region54: #{tpu_custom_call.1} parent=39 // pred_check_branch
          %623 = sbr.rel (%p621) target = $region56
        $region55: #{tpu_custom_call.1} parent=39 // pred_region
          %625 = vsyncadd %s617, 0
          %s626 = smul.addr %s23, 8
          %s627 = scalar_lea.hbm %s5, %s626
          %s629 = sshll.u32 %s620, 4
          %s630 = int_to_ptr.vmem [resolvable:$true] %s629
          %s631 = sshll.u32 %s627, 4
          %s632 = int_to_ptr.hbm [resolvable:$true] %s631
          %634 = dma.vmem_to_hbm [thread:$0]  %s630, 128, %s632, %s617
        $region56: #{tpu_custom_call.1} parent=39 // pred_fallthru
          _
      $region40: #{tpu_custom_call.1} parent=5 // pred_fallthru
        _
      %p635 = scmp.le.s32.totalorder 2, %s18
      // Predicated region
      $region57: #{tpu_custom_call.1} parent=5 // pred_check
        %p636 = pneg %p635
      $region58: #{tpu_custom_call.1} parent=5 // pred_check_branch
        %638 = sbr.rel (%p636) target = $region60
      $region59: #{tpu_custom_call.1} parent=5 // pred_region
        %s639 = ssub.s32 %s18, 2
        // Predicated region
        $region61: #{tpu_custom_call.1} parent=59 // pred_check
          %p640 = pneg %p157
        $region62: #{tpu_custom_call.1} parent=59 // pred_check_branch
          %642 = sbr.rel (%p640) target = $region64
        $region63: #{tpu_custom_call.1} parent=59 // pred_region
          %s643 = sand.u32 %s142, 1
          %s644 = scalar_lea.sflag [#allocation5], %s643
          %s645 = sand.u32 %s142, 1
          %s646 = smul.addr %s645, 8
          %s647 = scalar_lea.vmem [#allocation9], %s646
          %649 = dma.done %s644, 128
        $region64: #{tpu_custom_call.1} parent=59 // pred_fallthru
          _
      $region60: #{tpu_custom_call.1} parent=5 // pred_fallthru
        _
    $region6: #{tpu_custom_call.1} parent=1 // loop_footer
      %s22 = sadd.s32 1, %s18
    $region7: #{tpu_custom_call.1} parent=1 // loop_footer_branch
      %17 = sbr.rel target = $region3
    $region8: #{tpu_custom_call.1} parent=1 // loop_exit
      _
    %650 = vsyncpa [#allocation4], 1
    %s651 = scalar_lea.sflag [#allocation4], 1
    %652 = vsyncpa %s651, 1
    %653 = vsyncpa [#allocation7], 1
    %654 = vsyncpa [#allocation5], 1
    %s655 = scalar_lea.sflag [#allocation5], 1
    %656 = vsyncpa %s655, 1

</llo_original>
